<compile_context>
chip_gen: v7x
topology: tpu7x:2x2x1
jax: 0.10.0
libtpu: 0.0.40
codegen_flags: <defaults>
</compile_context>

<pallas_src>
import jax
import jax.numpy as jnp
from jax.experimental import pallas as pl
from jax.experimental.pallas import tpu as pltpu


def _pool_expand_kernel(x_ref, o_ref):
    # x_ref: (2, TC, L)  - row-parity pair of column-maxed values
    # o_ref: (2, TC, L)  - group 0: pooled result, group 1: zero channel pad
    m = jnp.maximum(x_ref[0], x_ref[1])      # finish the 2x2 max (row pair)
    o_ref[0] = m
    o_ref[1] = jnp.zeros_like(m)             # channel-expansion padding


def _pick_channel_block(C, L, itemsize):
    """Channels per grid step: largest block that divides C, keeps the
    second-minor block dim a multiple of 8 (or the full dim), and keeps the
    double-buffered working set small enough for v7x's 64 MiB VMEM."""
    budget = 4 * 1024 * 1024                 # per-step bytes (x2 for dbl-buffer)
    per_c = 2 * 2 * L * itemsize             # (in + out) * (2 parity/groups)
    if C % 8 != 0:
        return C                             # small / odd channel counts: whole dim
    tc = 8
    while C % (tc * 2) == 0 and (tc * 2) * per_c <= budget:
        tc *= 2
    return tc


def pool_expand(x, *, channel_block=None):
    N, C, H, W = x.shape
    Ho, Wo = H // 2, W // 2                  # floor, like nn.MaxPool2d(2)
    L = Ho * Wo

    # Single fused XLA prologue: column-pair (lane) max -- halves the data --
    # then move the row-parity axis outward.  The reshapes are free
    # (row-major); only half of x is ever re-written to HBM.
    xc = jnp.maximum(x[:, :, : 2 * Ho, 0 : 2 * Wo : 2],
                     x[:, :, : 2 * Ho, 1 : 2 * Wo : 2])        # (N, C, 2*Ho, Wo)
    xr = (xc.reshape(N, C, Ho, 2, Wo)
            .transpose(0, 3, 1, 2, 4)                          # (N, 2, C, Ho, Wo)
            .reshape(N, 2, C, L))

    tc = (channel_block if channel_block is not None
          else _pick_channel_block(C, L, x.dtype.itemsize))
    assert C % tc == 0, (C, tc)
    assert tc == C or tc % 8 == 0, (C, tc)

    out = pl.pallas_call(
        _pool_expand_kernel,
        out_shape=jax.ShapeDtypeStruct((N, 2, C, L), x.dtype),
        grid_spec=pltpu.PrefetchScalarGridSpec(
            num_scalar_prefetch=0,
            grid=(N, C // tc),
            in_specs=[
                pl.BlockSpec((None, 2, tc, L), lambda n, cb: (n, 0, cb, 0)),
            ],
            out_specs=pl.BlockSpec((None, 2, tc, L), lambda n, cb: (n, 0, cb, 0)),
        ),
        compiler_params=pltpu.CompilerParams(
            dimension_semantics=("parallel", "parallel"),
            vmem_limit_bytes=32 * 1024 * 1024,
        ),
    )(xr)

    # (N, 2, C, L) -> (N, 2C, Ho, Wo): free reshape; group 0 = pooled channels,
    # group 1 = zero padding, matching F.pad(x, (0,0,0,0,0,C)).
    return out.reshape(N, 2 * C, Ho, Wo)


def _reference(x):
    N, C, H, W = x.shape
    Ho, Wo = H // 2, W // 2
    pooled = jnp.max(
        x[:, :, : 2 * Ho, : 2 * Wo].reshape(N, C, Ho, 2, Wo, 2), axis=(3, 5))
    return jnp.concatenate([pooled, jnp.zeros_like(pooled)], axis=1)


if __name__ == "__main__":
    key = jax.random.PRNGKey(0)
    k1, k2 = jax.random.split(key)

    # Primary shape from the module spec.
    x = jax.random.normal(k1, (2, 4, 16, 16), dtype=jnp.float32)
    out = jax.block_until_ready(pool_expand(x))
    ref = _reference(x)
    assert out.shape == (2, 8, 8, 8), out.shape
    assert jnp.allclose(out, ref), "Pallas output does not match reference"

    # Second case exercising multi-block channel tiling (TC < C).
    x2 = jax.random.normal(k2, (1, 16, 8, 8), dtype=jnp.float32)
    out2 = jax.block_until_ready(pool_expand(x2, channel_block=8))
    ref2 = _reference(x2)
    assert out2.shape == (1, 32, 4, 4), out2.shape
    assert jnp.allclose(out2, ref2), "Pallas output does not match reference (case 2)"

    print("KERNEL_OK")
</pallas_src>

<mosaic_0001>
module attributes {stable_mosaic.version = 11 : i64} {
  func.func @_pool_expand_kernel(%arg0: i32, %arg1: i32, %arg2: memref<1x2x4x64xf32, #tpu.memory_space<vmem>>, %arg3: memref<1x2x4x64xf32, #tpu.memory_space<vmem>>) attributes {dimension_semantics = [#tpu.dimension_semantics<parallel>, #tpu.dimension_semantics<parallel>], iteration_bounds = array<i64: 2, 1>, scalar_prefetch = 0 : i64, scratch_operands = 0 : i64, tpu.core_type = #tpu.core_type<tc>, window_params = [{transform_indices = @transform_0, window_bounds = array<i64: 1, 2, 4, 64>}, {transform_indices = @transform_1, window_bounds = array<i64: 1, 2, 4, 64>}]} {
    %c0 = arith.constant 0 : index
    %c0_0 = arith.constant 0 : index
    %c0_1 = arith.constant 0 : index
    %c0_2 = arith.constant 0 : index
    %0 = vector.load %arg2[%c0, %c0_0, %c0_1, %c0_2] : memref<1x2x4x64xf32, #tpu.memory_space<vmem>>, vector<1x1x4x64xf32>
    %1 = vector.shape_cast %0 : vector<1x1x4x64xf32> to vector<4x64xf32>
    %c0_3 = arith.constant 0 : index
    %c1 = arith.constant 1 : index
    %c0_4 = arith.constant 0 : index
    %c0_5 = arith.constant 0 : index
    %2 = vector.load %arg2[%c0_3, %c1, %c0_4, %c0_5] : memref<1x2x4x64xf32, #tpu.memory_space<vmem>>, vector<1x1x4x64xf32>
    %3 = vector.shape_cast %2 : vector<1x1x4x64xf32> to vector<4x64xf32>
    %4 = arith.maximumf %1, %3 : vector<4x64xf32>
    %c0_6 = arith.constant 0 : index
    %c0_7 = arith.constant 0 : index
    %c0_8 = arith.constant 0 : index
    %c0_9 = arith.constant 0 : index
    %5 = vector.load %arg3[%c0_6, %c0_7, %c0_8, %c0_9] : memref<1x2x4x64xf32, #tpu.memory_space<vmem>>, vector<1x1x4x64xf32>
    %6 = vector.shape_cast %5 : vector<1x1x4x64xf32> to vector<4x64xf32>
    %7 = vector.shape_cast %4 : vector<4x64xf32> to vector<1x1x4x64xf32>
    tpu.vector_store %arg3[%c0_6, %c0_7, %c0_8, %c0_9], %7 {strides = array<i32>} : memref<1x2x4x64xf32, #tpu.memory_space<vmem>>, vector<1x1x4x64xf32>,
    %cst = arith.constant 0.000000e+00 : f32
    %8 = vector.broadcast %cst : f32 to vector<4x64xf32>
    %c0_10 = arith.constant 0 : index
    %c1_11 = arith.constant 1 : index
    %c0_12 = arith.constant 0 : index
    %c0_13 = arith.constant 0 : index
    %9 = vector.load %arg3[%c0_10, %c1_11, %c0_12, %c0_13] : memref<1x2x4x64xf32, #tpu.memory_space<vmem>>, vector<1x1x4x64xf32>
    %10 = vector.shape_cast %9 : vector<1x1x4x64xf32> to vector<4x64xf32>
    %11 = vector.shape_cast %8 : vector<4x64xf32> to vector<1x1x4x64xf32>
    tpu.vector_store %arg3[%c0_10, %c1_11, %c0_12, %c0_13], %11 {strides = array<i32>} : memref<1x2x4x64xf32, #tpu.memory_space<vmem>>, vector<1x1x4x64xf32>,
    return
  }
  func.func @transform_0(%arg0: i32, %arg1: i32) -> (i32, i32, i32, i32) {
    %c0_i32 = arith.constant 0 : i32
    %c0_i32_0 = arith.constant 0 : i32
    %c0_i32_1 = arith.constant 0 : i32
    return %arg0, %c0_i32, %arg1, %c0_i32_0 : i32, i32, i32, i32
  }
  func.func @transform_1(%arg0: i32, %arg1: i32) -> (i32, i32, i32, i32) {
    %c0_i32 = arith.constant 0 : i32
    %c0_i32_0 = arith.constant 0 : i32
    %c0_i32_1 = arith.constant 0 : i32
    return %arg0, %c0_i32, %arg1, %c0_i32_0 : i32, i32, i32, i32
  }
}

</mosaic_0001>

<llo_original>
// kernel: tpu_custom_call.1
$region0: #{tpu_custom_call.1}
  #allocation0 [shape = 'u32[]', space=smem, size = 0x4, offset = 0x4, fixed_abs, tag = 'smem constant byte address 0x4 - core index']
  #allocation1 [shape = 'u32[144,128]{1,0:T(1,128)}', space=vmem, size = 0x12000, scoped, tag = 'internal scratch']
  %s0 = inlined_call_operand.hbm [shape: f32[2,2,4,64], index: 0, kind: input, shape index: {}]
  %s1 = inlined_call_operand.hbm [shape: f32[2,2,4,64], index: 1, kind: output, shape index: {}]
  %s2 = sld [smem:[#allocation0]]
  $region41: #{tpu_custom_call.1} parent=0
    _
  %s4 = ssub.s32 1, %s2
  %s5 = scalar_select 0, %s4, %s2
  $region1: #{tpu_custom_call.1} parent=0
    #allocation2 [shape = 'u8[8192]{0}', space=vmem, size = 0x2000, scoped, tag = 'input window, operand 0']
    #allocation3 [shape = 's32[2]{0}', space=sflag, size = 0x8, scoped, tag = 'scoped memory for tpu_custom_call.1']
    #allocation4 [shape = 's32[2]{0}', space=sflag, size = 0x8, scoped, tag = 'scoped memory for tpu_custom_call.1']
    #allocation5 [shape = 'u8[8192]{0}', space=vmem, size = 0x2000, scoped, tag = 'output window, operand 0']
    %6 = vsyncpa [#allocation3], 0
    %s7 = scalar_lea.sflag [#allocation3], 1
    %8 = vsyncpa %s7, 0
    %9 = vsyncpa [#allocation4], 0
    %s10 = scalar_lea.sflag [#allocation4], 1
    %11 = vsyncpa %s10, 0
    loop: start=0, step=1, limit=4
    $region2: #{tpu_custom_call.1} parent=1 // loop_pre_header
      _
    $region3: #{tpu_custom_call.1} parent=1 // loop_header
      %s13 = sphi 0, %s17
      %p14 = scmp.ge.s32.totalorder %s13, 4
      %s20 = sphi 0, %s32
      %s21 = sphi 0, %s28
      %s22 = sphi 0, %s20
      %s23 = sphi 0, %s21
      %s24 = sphi 0, %s22
      %s25 = sphi 0, %s23
      %s37 = sphi 0, %s39
      %s40 = sphi 0, %s37
      %s41 = sphi 0, %s40
      %s57 = sphi 0, %s41
      %s65 = sphi 0, %s67
      %s68 = sphi 0, %s65
      %s69 = sphi 0, %s68
      %s85 = sphi 0, %s69
    $region4: #{tpu_custom_call.1} parent=1 // loop_header_branch
      %16 = sbr.rel (%p14) target = $region8
    $region5: #{tpu_custom_call.1} parent=1 // loop_body
      %s18 = ssub.s32 %s13, 1
      %s19 = ssub.s32 %s13, 2
      %s26 = sadd.s32 1, %s21
      %p27 = scmp.ge.s32.totalorder %s26, 1
      %s28 = scalar_select %p27, 0, %s26
      %s29 = sadd.s32 1, %s20
      %s30 = scalar_select %p27, %s29, %s20
      %p31 = scmp.ge.s32.totalorder %s30, 2
      %s32 = scalar_select %p31, 0, %s30
      %s33 = ssub.s32 %s20, %s32
      %s34 = ssub.s32 %s21, %s28
      %s35 = sor.u32 %s33, %s34
      %p36 = scmp.eq.s32.totalorder %s35, 0
      %s38 = sadd.s32 %s37, 1
      %s39 = scalar_select %p36, %s37, %s38
      %p42 = pneg %p36
      %p43 = scmp.eq.s32.totalorder %s13, 1
      %p44 = por %p42, %p43
      %p45 = scmp.ne.s32.totalorder %s37, %s40
      %p46 = scmp.eq.s32.totalorder %s13, 0
      %p47 = por %p45, %p46
      %p48 = scmp.ne.s32.totalorder %s37, %s40
      %p49 = scmp.eq.s32.totalorder %s18, 1
      %p50 = por %p48, %p49
      %p51 = scmp.ne.s32.totalorder %s40, %s41
      %p52 = scmp.eq.s32.totalorder %s18, 0
      %p53 = por %p51, %p52
      %p54 = scmp.ne.s32.totalorder %s40, %s41
      %p55 = scmp.eq.s32.totalorder %s19, 1
      %p56 = por %p54, %p55
      %p58 = scmp.ne.s32.totalorder %s41, %s57
      %p59 = scmp.eq.s32.totalorder %s19, 0
      %p60 = por %p58, %p59
      %s61 = ssub.s32 %s20, %s32
      %s62 = ssub.s32 %s21, %s28
      %s63 = sor.u32 %s61, %s62
      %p64 = scmp.eq.s32.totalorder %s63, 0
      %s66 = sadd.s32 %s65, 1
      %s67 = scalar_select %p64, %s65, %s66
      %p70 = pneg %p64
      %p71 = scmp.eq.s32.totalorder %s13, 1
      %p72 = por %p70, %p71
      %p73 = scmp.ne.s32.totalorder %s65, %s68
      %p74 = scmp.eq.s32.totalorder %s13, 0
      %p75 = por %p73, %p74
      %p76 = scmp.ne.s32.totalorder %s65, %s68
      %p77 = scmp.eq.s32.totalorder %s18, 1
      %p78 = por %p76, %p77
      %p79 = scmp.ne.s32.totalorder %s68, %s69
      %p80 = scmp.eq.s32.totalorder %s18, 0
      %p81 = por %p79, %p80
      %p82 = scmp.ne.s32.totalorder %s68, %s69
      %p83 = scmp.eq.s32.totalorder %s19, 1
      %p84 = por %p82, %p83
      %p86 = scmp.ne.s32.totalorder %s69, %s85
      %p87 = scmp.eq.s32.totalorder %s19, 0
      %p88 = por %p86, %p87
      %p89 = scmp.le.s32.totalorder 1, %s13
      %p90 = scmp.lt.s32.totalorder %s13, 3
      %p91 = pnand %p89, %p90
      %p92 = pneg %p91
      // Predicated region
      $region9: #{tpu_custom_call.1} parent=5 // pred_check
        _
      $region10: #{tpu_custom_call.1} parent=5 // pred_check_branch
        %94 = sbr.rel (%p91) target = $region12
      $region11: #{tpu_custom_call.1} parent=5 // pred_region
        %s95 = ssub.s32 %s13, 1
      $region12: #{tpu_custom_call.1} parent=5 // pred_fallthru
        _
      %p96 = scmp.lt.s32.totalorder %s13, 2
      // Predicated region
      $region13: #{tpu_custom_call.1} parent=5 // pred_check
        %p97 = pneg %p96
      $region14: #{tpu_custom_call.1} parent=5 // pred_check_branch
        %99 = sbr.rel (%p97) target = $region16
      $region15: #{tpu_custom_call.1} parent=5 // pred_region
        // Predicated region
        $region17: #{tpu_custom_call.1} parent=15 // pred_check
          %p100 = pneg %p47
        $region18: #{tpu_custom_call.1} parent=15 // pred_check_branch
          %102 = sbr.rel (%p100) target = $region20
        $region19: #{tpu_custom_call.1} parent=15 // pred_region
          %s103 = sand.u32 %s37, 1
          %s104 = scalar_lea.sflag [#allocation3], %s103
          %s105 = sand.u32 %s37, 1
          %s106 = smul.addr %s105, 8
          %s107 = scalar_lea.vmem [#allocation2], %s106
          %s109 = ssub.s32 128, 128
          %110 = vsyncadd %s104, %s109
          %s111 = smul.addr %s20, 2
          %s112 = sadd.s32 %s21, %s111
          %s113 = smul.addr %s112, 64
          %s114 = scalar_lea.hbm %s0, %s113
          %s115 = sshll.u32 %s107, 4
          %s116 = int_to_ptr.vmem [resolvable:$true] %s115
          %121 = dma.hbm_to_vmem [thread:$0]  %s114, 128, %s116, %s104, 64, 64, 4
        $region20: #{tpu_custom_call.1} parent=15 // pred_fallthru
          _
      $region16: #{tpu_custom_call.1} parent=5 // pred_fallthru
        _
      %p122 = scmp.le.s32.totalorder 1, %s13
      %p123 = scmp.lt.s32.totalorder %s13, 3
      %p124 = pnand %p122, %p123
      %p125 = pneg %p124
      // Predicated region
      $region21: #{tpu_custom_call.1} parent=5 // pred_check
        _
      $region22: #{tpu_custom_call.1} parent=5 // pred_check_branch
        %127 = sbr.rel (%p124) target = $region24
      $region23: #{tpu_custom_call.1} parent=5 // pred_region
        %s128 = ssub.s32 %s13, 1
        %s129 = sand.u32 %s40, 1
        %s130 = scalar_lea.sflag [#allocation3], %s129
        %s131 = sand.u32 %s40, 1
        %s132 = smul.addr %s131, 8
        %s133 = scalar_lea.vmem [#allocation2], %s132
        // Predicated region
        $region25: #{tpu_custom_call.1} parent=23 // pred_check
          %p134 = pneg %p53
        $region26: #{tpu_custom_call.1} parent=23 // pred_check_branch
          %136 = sbr.rel (%p134) target = $region28
        $region27: #{tpu_custom_call.1} parent=23 // pred_region
          %137 = dma.done %s130, 128
        $region28: #{tpu_custom_call.1} parent=23 // pred_fallthru
          _
        %s138 = sand.u32 %s40, 1
        %s139 = scalar_lea.sflag [#allocation3], %s138
        %s140 = sand.u32 %s40, 1
        %s141 = smul.addr %s140, 8
        %s142 = scalar_lea.vmem [#allocation2], %s141
        %p143 = pneg %p53
        %p144 = pneg %p50
        %p145 = pneg %p81
        %p146 = pneg %p78
        %s147 = sand.u32 %s68, 1
        %s148 = scalar_lea.sflag [#allocation4], %s147
        %s149 = sand.u32 %s68, 1
        %s150 = smul.addr %s149, 8
        %s151 = scalar_lea.vmem [#allocation5], %s150
        %v152 = vld [vmem:[%s133] sm:$0xf]
        %s153 = scalar_lea.vmem %s133, 4 [#allocation2]
        %v154 = vld [vmem:[%s153] sm:$0xf]
        %v155 = vmax.f32 %v152, %v154
        %vm156 = vcmask 519168
        %157 = vst.msk [vmem:[%s151] sm:$0xf] %vm156, %v155
        %s158 = scalar_lea.vmem %s151, 4 [#allocation5]
        %159 = vst.msk [vmem:[%s158] sm:$0xf] %vm156, 0.0
        %s160 = sand.u32 %s68, 1
        %s161 = scalar_lea.sflag [#allocation4], %s160
        %s162 = sand.u32 %s68, 1
        %s163 = smul.addr %s162, 8
        %s164 = scalar_lea.vmem [#allocation5], %s163
        // Predicated region
        $region29: #{tpu_custom_call.1} parent=23 // pred_check
          %p165 = pneg %p78
        $region30: #{tpu_custom_call.1} parent=23 // pred_check_branch
          %167 = sbr.rel (%p165) target = $region32
        $region31: #{tpu_custom_call.1} parent=23 // pred_region
          %s169 = ssub.s32 128, 128
          %170 = vsyncadd %s161, %s169
          %s171 = smul.addr %s22, 2
          %s172 = sadd.s32 %s23, %s171
          %s173 = smul.addr %s172, 64
          %s174 = scalar_lea.hbm %s1, %s173
          %s175 = sshll.u32 %s164, 4
          %s176 = int_to_ptr.vmem [resolvable:$true] %s175
          %181 = dma.vmem_to_hbm [thread:$0]  %s176, 128, %s174, %s161, 64, 64, 4
        $region32: #{tpu_custom_call.1} parent=23 // pred_fallthru
          _
      $region24: #{tpu_custom_call.1} parent=5 // pred_fallthru
        _
      %p182 = scmp.le.s32.totalorder 2, %s13
      // Predicated region
      $region33: #{tpu_custom_call.1} parent=5 // pred_check
        %p183 = pneg %p182
      $region34: #{tpu_custom_call.1} parent=5 // pred_check_branch
        %185 = sbr.rel (%p183) target = $region36
      $region35: #{tpu_custom_call.1} parent=5 // pred_region
        %s186 = ssub.s32 %s13, 2
        // Predicated region
        $region37: #{tpu_custom_call.1} parent=35 // pred_check
          %p187 = pneg %p84
        $region38: #{tpu_custom_call.1} parent=35 // pred_check_branch
          %189 = sbr.rel (%p187) target = $region40
        $region39: #{tpu_custom_call.1} parent=35 // pred_region
          %s190 = sand.u32 %s69, 1
          %s191 = scalar_lea.sflag [#allocation4], %s190
          %s192 = sand.u32 %s69, 1
          %s193 = smul.addr %s192, 8
          %s194 = scalar_lea.vmem [#allocation5], %s193
          %195 = dma.done %s191, 128
        $region40: #{tpu_custom_call.1} parent=35 // pred_fallthru
          _
      $region36: #{tpu_custom_call.1} parent=5 // pred_fallthru
        _
    $region6: #{tpu_custom_call.1} parent=1 // loop_footer
      %s17 = sadd.s32 1, %s13
    $region7: #{tpu_custom_call.1} parent=1 // loop_footer_branch
      %12 = sbr.rel target = $region3
    $region8: #{tpu_custom_call.1} parent=1 // loop_exit
      _
    %196 = vsyncpa [#allocation3], 1
    %s197 = scalar_lea.sflag [#allocation3], 1
    %198 = vsyncpa %s197, 1
    %199 = vsyncpa [#allocation4], 1
    %s200 = scalar_lea.sflag [#allocation4], 1
    %201 = vsyncpa %s200, 1

</llo_original>
